<compile_context>
chip_gen: v5e
topology: v5e:2x2
jax: 0.10.0
libtpu: 0.0.40
codegen_flags: <defaults>
</compile_context>

<pallas_src>
import functools

import jax
import jax.numpy as jnp
from jax.experimental import pallas as pl
from jax.experimental.pallas import tpu as pltpu

_VMEM_LIMIT = 32 * 1024 * 1024


def _round_up(x, m):
    return ((x + m - 1) // m) * m


def _pick_tile(dim, align, max_tile):
    """Return (tile, padded_dim): tile is align-multiple, padded_dim % tile == 0."""
    d = _round_up(dim, align)
    if d <= max_tile:
        return d, d
    n = -(-d // max_tile)                     # ceil
    tile = _round_up(-(-d // n), align)
    return tile, tile * n


# ----------------------------------------------------------------------------
# Tiled matmul kernel with fused per-column scale/shift (+ optional ReLU)
# ----------------------------------------------------------------------------

def _mm_scale_shift_kernel(x_ref, w_ref, scale_ref, shift_ref, o_ref, acc_ref, *, relu):
    k = pl.program_id(2)

    @pl.when(k == 0)
    def _():
        acc_ref[...] = jnp.zeros_like(acc_ref)

    acc_ref[...] += jnp.dot(x_ref[...], w_ref[...], preferred_element_type=jnp.float32)

    @pl.when(k == pl.num_programs(2) - 1)
    def _():
        y = acc_ref[...] * scale_ref[...] + shift_ref[...]
        if relu:
            y = jnp.maximum(y, 0.0)
        o_ref[...] = y.astype(o_ref.dtype)


def prep_mm_weights(w, scale, shift, *, max_tn=128, max_tk=1024):
    """One-time weight-side prep: bf16 cast + K/N padding + folded scale/shift."""
    K, N = w.shape
    TN, Np = _pick_tile(N, 128, max_tn)
    TK, Kp = _pick_tile(K, 128, max_tk)
    wb = w.astype(jnp.bfloat16)
    if (Kp, Np) != (K, N):
        wb = jnp.pad(wb, ((0, Kp - K), (0, Np - N)))
    sc = scale.reshape(1, N).astype(jnp.float32)
    sh = shift.reshape(1, N).astype(jnp.float32)
    if Np != N:
        sc = jnp.pad(sc, ((0, 0), (0, Np - N)))
        sh = jnp.pad(sh, ((0, 0), (0, Np - N)))
    return {"wb": wb, "sc": sc, "sh": sh, "k": K, "n": N, "tk": TK, "tn": TN}


def mm_apply(x, mmw, *, relu=False, out_dtype=jnp.float32):
    """o = act((x @ w) * scale + shift) using prepared weights; bf16 MXU, f32 acc."""
    M, K = x.shape
    assert K == mmw["k"], (K, mmw["k"])
    Kp, Np = mmw["wb"].shape
    TK, TN, N = mmw["tk"], mmw["tn"], mmw["n"]
    TM, Mp = _pick_tile(M, 16, 256)            # 16-aligned M tiles for bf16 LHS

    xb = x.astype(jnp.bfloat16)                # cast BEFORE padding
    if Mp != M or Kp != K:
        xb = jnp.pad(xb, ((0, Mp - M), (0, Kp - K)))

    grid = (Mp // TM, Np // TN, Kp // TK)
    cost = pl.CostEstimate(
        flops=2 * Mp * Np * Kp,
        transcendentals=0,
        bytes_accessed=Mp * Kp * 2 + Kp * Np * 2 + Mp * Np * 4,
    )
    out = pl.pallas_call(
        functools.partial(_mm_scale_shift_kernel, relu=relu),
        out_shape=jax.ShapeDtypeStruct((Mp, Np), out_dtype),
        grid=grid,
        in_specs=[
            pl.BlockSpec((TM, TK), lambda i, j, k: (i, k)),
            pl.BlockSpec((TK, TN), lambda i, j, k: (k, j)),
            pl.BlockSpec((1, TN), lambda i, j, k: (0, j)),
            pl.BlockSpec((1, TN), lambda i, j, k: (0, j)),
        ],
        out_specs=pl.BlockSpec((TM, TN), lambda i, j, k: (i, j)),
        scratch_shapes=[pltpu.VMEM((TM, TN), jnp.float32)],
        compiler_params=pltpu.CompilerParams(
            dimension_semantics=("parallel", "parallel", "arbitrary"),
            vmem_limit_bytes=_VMEM_LIMIT,
        ),
        cost_estimate=cost,
    )(xb, mmw["wb"], mmw["sc"], mmw["sh"])

    if Mp != M or Np != N:
        out = out[:M, :N]
    return out


# ----------------------------------------------------------------------------
# MaxPool2d(2,2): one BlockSpec over a free strided view, 4-way max in-kernel
# ----------------------------------------------------------------------------

def _maxpool_kernel(x_ref, o_ref):
    a = x_ref[:, 0:1, :, 0:1, :]
    b = x_ref[:, 0:1, :, 1:2, :]
    c = x_ref[:, 1:2, :, 0:1, :]
    d = x_ref[:, 1:2, :, 1:2, :]
    o_ref[...] = jnp.maximum(jnp.maximum(a, b), jnp.maximum(c, d))


def maxpool2x2(x):
    """MaxPool2d((2,2),(2,2)) on NHWC input; single input DMA stream, no XLA gathers."""
    B, H, W, C = x.shape
    Ho, Wo = H // 2, W // 2
    M = B * Ho
    xr = x.reshape(M, 2, Wo, 2, C)             # contiguous view, no copy
    TM, Mp = _pick_tile(M, 8, 512)
    if Mp != M:
        xr = jnp.pad(xr, ((0, Mp - M), (0, 0), (0, 0), (0, 0), (0, 0)))

    out = pl.pallas_call(
        _maxpool_kernel,
        out_shape=jax.ShapeDtypeStruct((Mp, 1, Wo, 1, C), x.dtype),
        grid=(Mp // TM,),
        in_specs=[pl.BlockSpec((TM, 2, Wo, 2, C), lambda i: (i, 0, 0, 0, 0))],
        out_specs=pl.BlockSpec((TM, 1, Wo, 1, C), lambda i: (i, 0, 0, 0, 0)),
        compiler_params=pltpu.CompilerParams(
            dimension_semantics=("parallel",),
            vmem_limit_bytes=_VMEM_LIMIT,
        ),
    )(xr)
    if Mp != M:
        out = out[:M]
    return out.reshape(B, Ho, Wo, C)


# ----------------------------------------------------------------------------
# Bidirectional GRU: one kernel per layer, grid=(2,) over direction ("parallel"
# -> one direction per TensorCore on v7x), full time loop inside the body.
# The final Linear layer is fused into the last layer's epilogue.
# ----------------------------------------------------------------------------

def _bigru_kernel(*refs, hidden, seq_len, with_fc):
    if with_fc:
        gx_ref, whh_ref, bhh_ref, wfc_ref, o_ref, fc_ref, h_ref = refs
    else:
        gx_ref, whh_ref, bhh_ref, o_ref, h_ref = refs

    H = hidden
    d = pl.program_id(0)                      # 0 = forward, 1 = backward
    h_ref[...] = jnp.zeros_like(h_ref)
    whh = whh_ref[...]                        # bf16 [H, 3H]
    bhh = bhh_ref[...]                        # f32  [1, 3H]

    def step(t, carry):
        ti = jnp.where(d == 0, t, seq_len - 1 - t)
        gx = gx_ref[ti]                       # [Bp, 3H] f32 (this direction's columns)
        h = h_ref[...]                        # [Bp, H]  f32
        gh = jnp.dot(h.astype(jnp.bfloat16), whh,
                     preferred_element_type=jnp.float32) + bhh
        r = jax.nn.sigmoid(gx[:, 0 * H:1 * H] + gh[:, 0 * H:1 * H])
        z = jax.nn.sigmoid(gx[:, 1 * H:2 * H] + gh[:, 1 * H:2 * H])
        n = jnp.tanh(gx[:, 2 * H:3 * H] + r * gh[:, 2 * H:3 * H])
        h_new = (1.0 - z) * n + z * h
        h_ref[...] = h_new
        o_ref[ti] = h_new                     # write own half of [T, Bp, 2H] directly
        return carry

    jax.lax.fori_loop(0, seq_len, step, 0, unroll=(seq_len <= 16))

    if with_fc:
        # Fused final Linear: this direction's partial contribution (summed outside).
        Bp = h_ref.shape[0]
        seq = o_ref[...].reshape(seq_len * Bp, H).astype(jnp.bfloat16)
        part = jnp.dot(seq, wfc_ref[...], preferred_element_type=jnp.float32)
        fc_ref[...] = part.reshape(seq_len, Bp, -1)


def prep_gru_layer(p_fwd, p_bwd, hidden):
    wih_f, whh_f, bih_f, bhh_f = p_fwd
    wih_b, whh_b, bih_b, bhh_b = p_bwd
    G = 3 * hidden
    w_cat = jnp.concatenate([wih_f.T, wih_b.T], axis=1)                  # [I, 6H]
    b_cat = jnp.concatenate([bih_f, bih_b], axis=0)                      # [6H]
    mm = prep_mm_weights(w_cat, jnp.ones((2 * G,), jnp.float32), b_cat)
    whh = jnp.stack([whh_f.T, whh_b.T], axis=0).astype(jnp.bfloat16)     # [2, H, 3H]
    bhh = jnp.stack([bhh_f, bhh_b], axis=0).reshape(2, 1, G).astype(jnp.float32)
    return {"mm": mm, "whh": whh, "bhh": bhh, "hidden": hidden}


def prep_fc(fc_w, fc_b, hidden, num_classes):
    ncp = _round_up(num_classes, 128)                                    # lane-dense store
    wt = fc_w.T                                                          # [2H, nc]
    w_all = jnp.stack([wt[:hidden], wt[hidden:]], axis=0)                # [2, H, nc]
    w_all = jnp.pad(w_all, ((0, 0), (0, 0), (0, ncp - num_classes))).astype(jnp.bfloat16)
    b = jnp.pad(fc_b.astype(jnp.float32), (0, ncp - num_classes))
    return {"w": w_all, "b": b, "ncp": ncp}


def gru_bidirectional_layer(x_seq, gp, fc=None):
    """x_seq: [T, Bp, I] -> (h_seq [T, Bp, 2H], fused-FC logits [T, Bp, ncp] or None)."""
    T, Bp, I = x_seq.shape
    H = gp["hidden"]
    G = 3 * H

    # Input projections for both directions in one matmul (M=T*Bp, K=I, N=6H); shapes
    # are tile-aligned here so this call runs with zero padding glue.
    gx = mm_apply(x_seq.reshape(T * Bp, I), gp["mm"]).reshape(T, Bp, 2 * G)

    with_fc = fc is not None
    in_specs = [
        pl.BlockSpec((T, Bp, G), lambda d: (0, 0, d)),       # per-direction gate columns
        pl.BlockSpec((None, H, G), lambda d: (d, 0, 0)),
        pl.BlockSpec((None, 1, G), lambda d: (d, 0, 0)),
    ]
    operands = [gx, gp["whh"], gp["bhh"]]
    out_shapes = [jax.ShapeDtypeStruct((T, Bp, 2 * H), jnp.float32)]
    out_specs = [pl.BlockSpec((T, Bp, H), lambda d: (0, 0, d))]
    if with_fc:
        ncp = fc["ncp"]
        in_specs.append(pl.BlockSpec((None, H, ncp), lambda d: (d, 0, 0)))
        operands.append(fc["w"])
        out_shapes.append(jax.ShapeDtypeStruct((2, T, Bp, ncp), jnp.float32))
        out_specs.append(pl.BlockSpec((None, T, Bp, ncp), lambda d: (d, 0, 0, 0)))

    cost = pl.CostEstimate(
        flops=2 * 2 * T * Bp * H * G
        + (2 * 2 * T * Bp * H * (fc["ncp"] if with_fc else 0)),
        transcendentals=2 * T * Bp * G,
        bytes_accessed=gx.size * 4 + gp["whh"].size * 2 + 2 * T * Bp * H * 4,
    )
    outs = pl.pallas_call(
        functools.partial(_bigru_kernel, hidden=H, seq_len=T, with_fc=with_fc),
        out_shape=tuple(out_shapes) if with_fc else out_shapes[0],
        grid=(2,),
        in_specs=in_specs,
        out_specs=tuple(out_specs) if with_fc else out_specs[0],
        scratch_shapes=[pltpu.VMEM((Bp, H), jnp.float32)],
        compiler_params=pltpu.CompilerParams(
            # NOTE: on single-TC v5e/v6e this axis serializes; merging both directions
            # into one program would co-issue their recurrences there.
            dimension_semantics=("parallel",),
            vmem_limit_bytes=_VMEM_LIMIT,
        ),
        cost_estimate=cost,
    )(*operands)

    if with_fc:
        h_seq, fc_part = outs
        logits = fc_part[0] + fc_part[1] + fc["b"]
        return h_seq, logits
    return outs, None


# ----------------------------------------------------------------------------
# Conv + BN + ReLU as im2col matmul (channels-last / NHWC, precomputed weights)
# ----------------------------------------------------------------------------

def prep_conv(conv_params, eps=1e-5):
    """Fold BN into per-channel scale/shift and reorder the conv weight once."""
    w, b, gamma, beta, mean, var = conv_params
    cout, cin, kh, kw = w.shape
    wmat = w.transpose(2, 3, 1, 0).reshape(kh * kw * cin, cout)   # (kh, kw, cin) order
    scale = gamma / jnp.sqrt(var + eps)
    shift = scale * b + (beta - mean * scale)
    return {"mm": prep_mm_weights(wmat, scale, shift),
            "kh": kh, "kw": kw, "cin": cin, "cout": cout}


def conv_bn_relu(x, cp, *, ph, pw):
    """x: NHWC [B,H,W,Cin] -> NHWC [B,Ho,Wo,Cout] (bf16); conv as im2col matmul with
    fused BN scale/shift + ReLU epilogue."""
    B, H, W, C = x.shape
    kh, kw, cout = cp["kh"], cp["kw"], cp["cout"]
    assert C == cp["cin"]
    xp = jnp.pad(x, ((0, 0), (ph, ph), (pw, pw), (0, 0)))
    Ho = H + 2 * ph - kh + 1
    Wo = W + 2 * pw - kw + 1
    cols = [xp[:, i:i + Ho, j:j + Wo, :] for i in range(kh) for j in range(kw)]
    patches = jnp.concatenate(cols, axis=-1).reshape(B * Ho * Wo, kh * kw * C)
    # TODO(synk): conv1 (Cin=1, K=9 lane-padded to 128) would be cheaper as a direct
    # 9-tap VPU kernel; kept on the uniform im2col/MXU path here.
    y = mm_apply(patches, cp["mm"], relu=True, out_dtype=jnp.bfloat16)
    return y.reshape(B, Ho, Wo, cout)


# ----------------------------------------------------------------------------
# Parameter init (PyTorch-default BN running stats), one-time prep, and forward
# ----------------------------------------------------------------------------

def init_params(key, n_mels, num_classes, hidden):
    ks = list(jax.random.split(key, 32))
    k = iter(ks)

    def conv_block(cin, cout, kh, kw):
        w = 0.05 * jax.random.normal(next(k), (cout, cin, kh, kw), jnp.float32)
        b = 0.01 * jax.random.normal(next(k), (cout,), jnp.float32)
        gamma = jnp.ones((cout,), jnp.float32)
        beta = jnp.zeros((cout,), jnp.float32)
        mean = jnp.zeros((cout,), jnp.float32)
        var = jnp.ones((cout,), jnp.float32)
        return (w, b, gamma, beta, mean, var)

    def gru_dir(input_size):
        s = 1.0 / jnp.sqrt(hidden)
        wih = s * jax.random.normal(next(k), (3 * hidden, input_size), jnp.float32)
        whh = s * jax.random.normal(next(k), (3 * hidden, hidden), jnp.float32)
        bih = s * jax.random.normal(next(k), (3 * hidden,), jnp.float32)
        bhh = s * jax.random.normal(next(k), (3 * hidden,), jnp.float32)
        return (wih, whh, bih, bhh)

    return {
        "conv1": conv_block(1, 32, 3, 3),
        "conv2": conv_block(32, 64, 3, 3),
        "conv3": conv_block(64, 128, 3, 3),
        "conv4": conv_block(128, 128, n_mels // 4, 3),
        "gru_l0_f": gru_dir(128),
        "gru_l0_b": gru_dir(128),
        "gru_l1_f": gru_dir(2 * hidden),
        "gru_l1_b": gru_dir(2 * hidden),
        "fc_w": 0.05 * jax.random.normal(next(k), (num_classes, 2 * hidden), jnp.float32),
        "fc_b": 0.01 * jax.random.normal(next(k), (num_classes,), jnp.float32),
    }


def prepare_params(params, hidden, num_classes):
    """One-time weight preparation: everything the forward pass needs, pre-padded/cast."""
    return {
        "conv1": prep_conv(params["conv1"]),
        "conv2": prep_conv(params["conv2"]),
        "conv3": prep_conv(params["conv3"]),
        "conv4": prep_conv(params["conv4"]),
        "gru0": prep_gru_layer(params["gru_l0_f"], params["gru_l0_b"], hidden),
        "gru1": prep_gru_layer(params["gru_l1_f"], params["gru_l1_b"], hidden),
        "fc": prep_fc(params["fc_w"], params["fc_b"], hidden, num_classes),
    }


def crnn_forward(x, prep, num_classes):
    """x: [batch, n_mels, time] -> [time_out, batch, num_classes] (pre-log_softmax)."""
    B = x.shape[0]
    x = x[..., None].astype(jnp.float32)                     # NHWC: [B, n_mels, T, 1]

    x = conv_bn_relu(x, prep["conv1"], ph=1, pw=1)
    x = maxpool2x2(x)
    x = conv_bn_relu(x, prep["conv2"], ph=1, pw=1)
    x = maxpool2x2(x)
    x = conv_bn_relu(x, prep["conv3"], ph=1, pw=1)
    x = conv_bn_relu(x, prep["conv4"], ph=0, pw=1)            # [B, 1, T/4, 128] bf16

    Bq, Hh, W, C = x.shape
    assert Hh == 1                                            # conv4 collapses height
    x = x.reshape(Bq, W, C).transpose(1, 0, 2)                # [T', B, 128]
    Bp = _round_up(max(Bq, 8), 8)                             # sublane-dense batch
    if Bp != Bq:
        x = jnp.pad(x, ((0, 0), (0, Bp - Bq), (0, 0)))

    h, _ = gru_bidirectional_layer(x, prep["gru0"])
    # TODO(synk): inter-layer GRU dropout and dropout_fc are identity in eval mode.
    _, logits = gru_bidirectional_layer(h, prep["gru1"], fc=prep["fc"])

    return logits[:, :B, :num_classes]                        # [T', B, num_classes]


# ----------------------------------------------------------------------------
# Main
# ----------------------------------------------------------------------------

if __name__ == "__main__":
    n_mels = 16
    num_classes = 10
    rnn_hidden_size = 128
    batch = 2
    time_steps = 16

    key = jax.random.PRNGKey(0)
    k_params, k_input = jax.random.split(key)

    params = init_params(k_params, n_mels, num_classes, rnn_hidden_size)
    prep = prepare_params(params, rnn_hidden_size, num_classes)   # one-time weight prep
    x = jax.random.normal(k_input, (batch, n_mels, time_steps), jnp.float32)

    out = crnn_forward(x, prep, num_classes)
    out = jax.block_until_ready(out)

    expected_shape = (time_steps // 4, batch, num_classes)    # [T_out, B, num_classes]
    assert out.shape == expected_shape, (out.shape, expected_shape)
    assert jnp.all(jnp.isfinite(out))
    print("KERNEL_OK")
</pallas_src>

<mosaic_0001>
module attributes {stable_mosaic.version = 11 : i64} {
  func.func @_mm_scale_shift_kernel(%arg0: i32, %arg1: i32, %arg2: i32, %arg3: memref<256x128xbf16, #tpu.memory_space<vmem>>, %arg4: memref<128x128xbf16, #tpu.memory_space<vmem>>, %arg5: memref<1x128xf32, #tpu.memory_space<vmem>>, %arg6: memref<1x128xf32, #tpu.memory_space<vmem>>, %arg7: memref<256x128xbf16, #tpu.memory_space<vmem>>, %arg8: memref<256x128xf32, #tpu.memory_space<vmem>>) attributes {dimension_semantics = [#tpu.dimension_semantics<parallel>, #tpu.dimension_semantics<parallel>, #tpu.dimension_semantics<arbitrary>], iteration_bounds = array<i64: 2, 1, 1>, scalar_prefetch = 0 : i64, scratch_operands = 1 : i64, tpu.core_type = #tpu.core_type<tc>, window_params = [{transform_indices = @transform_0, window_bounds = array<i64: 256, 128>}, {transform_indices = @transform_1, window_bounds = array<i64: 128, 128>}, {transform_indices = @transform_2, window_bounds = array<i64: 1, 128>}, {transform_indices = @transform_3, window_bounds = array<i64: 1, 128>}, {transform_indices = @transform_4, window_bounds = array<i64: 256, 128>}]} {
    %c0_i32 = arith.constant 0 : i32
    %0 = arith.cmpi eq, %arg2, %c0_i32 : i32
    %1 = arith.extui %0 : i1 to i32
    %c0_i32_0 = arith.constant 0 : i32
    %2 = arith.cmpi ne, %1, %c0_i32_0 : i32
    scf.if %2 {
      %cst_10 = arith.constant 0.000000e+00 : f32
      %12 = vector.broadcast %cst_10 : f32 to vector<256x128xf32>
      %c0_11 = arith.constant 0 : index
      %c0_12 = arith.constant 0 : index
      %13 = vector.load %arg8[%c0_11, %c0_12] : memref<256x128xf32, #tpu.memory_space<vmem>>, vector<256x128xf32>
      tpu.vector_store %arg8[%c0_11, %c0_12], %12 {strides = array<i32>} : memref<256x128xf32, #tpu.memory_space<vmem>>, vector<256x128xf32>,
    } else {
    }
    %c0 = arith.constant 0 : index
    %c0_1 = arith.constant 0 : index
    %3 = vector.load %arg8[%c0, %c0_1] : memref<256x128xf32, #tpu.memory_space<vmem>>, vector<256x128xf32>
    %c0_2 = arith.constant 0 : index
    %c0_3 = arith.constant 0 : index
    %4 = vector.load %arg3[%c0_2, %c0_3] : memref<256x128xbf16, #tpu.memory_space<vmem>>, vector<256x128xbf16>
    %c0_4 = arith.constant 0 : index
    %c0_5 = arith.constant 0 : index
    %5 = vector.load %arg4[%c0_4, %c0_5] : memref<128x128xbf16, #tpu.memory_space<vmem>>, vector<128x128xbf16>
    %cst = arith.constant dense<0.000000e+00> : vector<256x128xf32>
    %6 = tpu.matmul %4, %5, %cst {dimension_numbers = #tpu.dot_dimension_numbers<[1], [0], [0], [1], [0, 0, 1, 1], [], []>} : vector<256x128xbf16>, vector<128x128xbf16>, vector<256x128xf32> -> vector<256x128xf32>
    %7 = arith.addf %3, %6 : vector<256x128xf32>
    %c0_6 = arith.constant 0 : index
    %c0_7 = arith.constant 0 : index
    %8 = vector.load %arg8[%c0_6, %c0_7] : memref<256x128xf32, #tpu.memory_space<vmem>>, vector<256x128xf32>
    tpu.vector_store %arg8[%c0_6, %c0_7], %7 {strides = array<i32>} : memref<256x128xf32, #tpu.memory_space<vmem>>, vector<256x128xf32>,
    %c0_i32_8 = arith.constant 0 : i32
    %9 = arith.cmpi eq, %arg2, %c0_i32_8 : i32
    %10 = arith.extui %9 : i1 to i32
    %c0_i32_9 = arith.constant 0 : i32
    %11 = arith.cmpi ne, %10, %c0_i32_9 : i32
    scf.if %11 {
      %c0_10 = arith.constant 0 : index
      %c0_11 = arith.constant 0 : index
      %12 = vector.load %arg8[%c0_10, %c0_11] : memref<256x128xf32, #tpu.memory_space<vmem>>, vector<256x128xf32>
      %c0_12 = arith.constant 0 : index
      %c0_13 = arith.constant 0 : index
      %13 = vector.load %arg5[%c0_12, %c0_13] : memref<1x128xf32, #tpu.memory_space<vmem>>, vector<1x128xf32>
      %14 = vector.broadcast %13 : vector<1x128xf32> to vector<256x128xf32>
      %15 = arith.mulf %12, %14 : vector<256x128xf32>
      %c0_14 = arith.constant 0 : index
      %c0_15 = arith.constant 0 : index
      %16 = vector.load %arg6[%c0_14, %c0_15] : memref<1x128xf32, #tpu.memory_space<vmem>>, vector<1x128xf32>
      %17 = vector.broadcast %16 : vector<1x128xf32> to vector<256x128xf32>
      %18 = arith.addf %15, %17 : vector<256x128xf32>
      %cst_16 = arith.constant 0.000000e+00 : f32
      %19 = vector.broadcast %cst_16 : f32 to vector<256x128xf32>
      %20 = arith.maximumf %18, %19 : vector<256x128xf32>
      %21 = arith.truncf %20 : vector<256x128xf32> to vector<256x128xbf16>
      %c0_17 = arith.constant 0 : index
      %c0_18 = arith.constant 0 : index
      %22 = vector.load %arg7[%c0_17, %c0_18] : memref<256x128xbf16, #tpu.memory_space<vmem>>, vector<256x128xbf16>
      tpu.vector_store %arg7[%c0_17, %c0_18], %21 {strides = array<i32>} : memref<256x128xbf16, #tpu.memory_space<vmem>>, vector<256x128xbf16>,
    } else {
    }
    return
  }
  func.func @transform_0(%arg0: i32, %arg1: i32, %arg2: i32) -> (i32, i32) {
    %c0_i32 = arith.constant 0 : i32
    return %arg0, %arg2 : i32, i32
  }
  func.func @transform_1(%arg0: i32, %arg1: i32, %arg2: i32) -> (i32, i32) {
    %c0_i32 = arith.constant 0 : i32
    return %arg2, %arg1 : i32, i32
  }
  func.func @transform_2(%arg0: i32, %arg1: i32, %arg2: i32) -> (i32, i32) {
    %c0_i32 = arith.constant 0 : i32
    %c0_i32_0 = arith.constant 0 : i32
    return %c0_i32, %arg1 : i32, i32
  }
  func.func @transform_3(%arg0: i32, %arg1: i32, %arg2: i32) -> (i32, i32) {
    %c0_i32 = arith.constant 0 : i32
    %c0_i32_0 = arith.constant 0 : i32
    return %c0_i32, %arg1 : i32, i32
  }
  func.func @transform_4(%arg0: i32, %arg1: i32, %arg2: i32) -> (i32, i32) {
    %c0_i32 = arith.constant 0 : i32
    return %arg0, %arg1 : i32, i32
  }
}

</mosaic_0001>

<llo_original>
// kernel: tpu_custom_call.1
$region0: #{tpu_custom_call.1}
  #allocation0 [shape = 'u32[]', space=smem, size = 0x4, offset = 0x4, fixed_abs, tag = 'smem constant byte address 0x4 - core index']
  #allocation1 [shape = 'u32[72,128]{1,0:T(1,128)}', space=vmem, size = 0x9000, scoped, tag = 'internal scratch']
  #allocation2 [shape = 'f32[256,128]{1,0:T(8,128)}', space=vmem, size = 0x20000, scoped, tag = 'scratch operand']
  %s0 = inlined_call_operand.hbm [shape: bf16[512,128], index: 0, kind: input, shape index: {}]
  %s1 = inlined_call_operand.hbm [shape: bf16[128,128], index: 1, kind: input, shape index: {}]
  %s2 = inlined_call_operand.vmem [shape: f32[1,128], index: 2, kind: input, shape index: {}]
  %s3 = inlined_call_operand.vmem [shape: f32[1,128], index: 3, kind: input, shape index: {}]
  %s4 = inlined_call_operand.hbm [shape: bf16[512,128], index: 4, kind: output, shape index: {}]
  %s5 = sld [smem:[#allocation0]]
  $region65: #{tpu_custom_call.1} parent=0
    _
  %s7 = ssub.s32 1, %s5
  %s8 = scalar_select 0, %s7, %s5
  $region1: #{tpu_custom_call.1} parent=0
    #allocation3 [shape = 'u8[131072]{0}', space=vmem, size = 0x20000, scoped, tag = 'input window, operand 0']
    #allocation4 [shape = 's32[2]{0}', space=sflag, size = 0x8, scoped, tag = 'scoped memory for tpu_custom_call.1']
    #allocation5 [shape = 's32[2]{0}', space=sflag, size = 0x8, scoped, tag = 'scoped memory for tpu_custom_call.1']
    #allocation6 [shape = 'u8[32768]{0}', space=vmem, size = 0x8000, scoped, tag = 'input window, operand 1, single buffered']
    #allocation7 [shape = 's32[1]{0}', space=sflag, size = 0x4, scoped, tag = 'scoped memory for tpu_custom_call.1']
    #allocation8 [shape = 'u8[131072]{0}', space=vmem, size = 0x20000, scoped, tag = 'output window, operand 0']
    %9 = vsyncpa [#allocation4], 0
    %s10 = scalar_lea.sflag [#allocation4], 1
    %11 = vsyncpa %s10, 0
    %12 = vsyncpa [#allocation7], 0
    %13 = vsyncpa [#allocation5], 0
    %s14 = scalar_lea.sflag [#allocation5], 1
    %15 = vsyncpa %s14, 0
    loop: start=0, step=1, limit=4
    $region2: #{tpu_custom_call.1} parent=1 // loop_pre_header
      _
    $region3: #{tpu_custom_call.1} parent=1 // loop_header
      %s17 = sphi 0, %s21
      %p18 = scmp.ge.s32.totalorder %s17, 4
      %s24 = sphi 0, %s43
      %s25 = sphi 0, %s39
      %s26 = sphi 0, %s35
      %s27 = sphi 0, %s24
      %s28 = sphi 0, %s25
      %s29 = sphi 0, %s26
      %s30 = sphi 0, %s27
      %s31 = sphi 0, %s28
      %s32 = sphi 0, %s29
      %s48 = sphi 0, %s50
      %s51 = sphi 0, %s48
      %s52 = sphi 0, %s51
      %s68 = sphi 0, %s52
      %s76 = sphi 0, %s78
      %s79 = sphi 0, %s76
      %s80 = sphi 0, %s79
      %s96 = sphi 0, %s80
      %s102 = sphi 0, %s104
      %s105 = sphi 0, %s102
      %s106 = sphi 0, %s105
      %s122 = sphi 0, %s106
      %s128 = sphi 0, %s130
      %s131 = sphi 0, %s128
      %s132 = sphi 0, %s131
      %s148 = sphi 0, %s132
      %s156 = sphi 0, %s158
      %s159 = sphi 0, %s156
      %s160 = sphi 0, %s159
      %s176 = sphi 0, %s160
    $region4: #{tpu_custom_call.1} parent=1 // loop_header_branch
      %20 = sbr.rel (%p18) target = $region8
    $region5: #{tpu_custom_call.1} parent=1 // loop_body
      %s22 = ssub.s32 %s17, 1
      %s23 = ssub.s32 %s17, 2
      %s33 = sadd.s32 1, %s26
      %p34 = scmp.ge.s32.totalorder %s33, 1
      %s35 = scalar_select %p34, 0, %s33
      %s36 = sadd.s32 1, %s25
      %s37 = scalar_select %p34, %s36, %s25
      %p38 = scmp.ge.s32.totalorder %s37, 1
      %s39 = scalar_select %p38, 0, %s37
      %s40 = sadd.s32 1, %s24
      %s41 = scalar_select %p38, %s40, %s24
      %p42 = scmp.ge.s32.totalorder %s41, 2
      %s43 = scalar_select %p42, 0, %s41
      %s44 = ssub.s32 %s24, %s43
      %s45 = ssub.s32 %s26, %s35
      %s46 = sor.u32 %s44, %s45
      %p47 = scmp.eq.s32.totalorder %s46, 0
      %s49 = sadd.s32 %s48, 1
      %s50 = scalar_select %p47, %s48, %s49
      %p53 = pneg %p47
      %p54 = scmp.eq.s32.totalorder %s17, 1
      %p55 = por %p53, %p54
      %p56 = scmp.ne.s32.totalorder %s48, %s51
      %p57 = scmp.eq.s32.totalorder %s17, 0
      %p58 = por %p56, %p57
      %p59 = scmp.ne.s32.totalorder %s48, %s51
      %p60 = scmp.eq.s32.totalorder %s22, 1
      %p61 = por %p59, %p60
      %p62 = scmp.ne.s32.totalorder %s51, %s52
      %p63 = scmp.eq.s32.totalorder %s22, 0
      %p64 = por %p62, %p63
      %p65 = scmp.ne.s32.totalorder %s51, %s52
      %p66 = scmp.eq.s32.totalorder %s23, 1
      %p67 = por %p65, %p66
      %p69 = scmp.ne.s32.totalorder %s52, %s68
      %p70 = scmp.eq.s32.totalorder %s23, 0
      %p71 = por %p69, %p70
      %s72 = ssub.s32 %s26, %s35
      %s73 = ssub.s32 %s25, %s39
      %s74 = sor.u32 %s72, %s73
      %p75 = scmp.eq.s32.totalorder %s74, 0
      %s77 = sadd.s32 %s76, 1
      %s78 = scalar_select %p75, %s76, %s77
      %p81 = pneg %p75
      %p82 = scmp.eq.s32.totalorder %s17, 1
      %p83 = por %p81, %p82
      %p84 = scmp.ne.s32.totalorder %s76, %s79
      %p85 = scmp.eq.s32.totalorder %s17, 0
      %p86 = por %p84, %p85
      %p87 = scmp.ne.s32.totalorder %s76, %s79
      %p88 = scmp.eq.s32.totalorder %s22, 1
      %p89 = por %p87, %p88
      %p90 = scmp.ne.s32.totalorder %s79, %s80
      %p91 = scmp.eq.s32.totalorder %s22, 0
      %p92 = por %p90, %p91
      %p93 = scmp.ne.s32.totalorder %s79, %s80
      %p94 = scmp.eq.s32.totalorder %s23, 1
      %p95 = por %p93, %p94
      %p97 = scmp.ne.s32.totalorder %s80, %s96
      %p98 = scmp.eq.s32.totalorder %s23, 0
      %p99 = por %p97, %p98
      %s100 = ssub.s32 %s25, %s39
      %p101 = scmp.eq.s32.totalorder %s100, 0
      %s103 = sadd.s32 %s102, 1
      %s104 = scalar_select %p101, %s102, %s103
      %p107 = pneg %p101
      %p108 = scmp.eq.s32.totalorder %s17, 1
      %p109 = por %p107, %p108
      %p110 = scmp.ne.s32.totalorder %s102, %s105
      %p111 = scmp.eq.s32.totalorder %s17, 0
      %p112 = por %p110, %p111
      %p113 = scmp.ne.s32.totalorder %s102, %s105
      %p114 = scmp.eq.s32.totalorder %s22, 1
      %p115 = por %p113, %p114
      %p116 = scmp.ne.s32.totalorder %s105, %s106
      %p117 = scmp.eq.s32.totalorder %s22, 0
      %p118 = por %p116, %p117
      %p119 = scmp.ne.s32.totalorder %s105, %s106
      %p120 = scmp.eq.s32.totalorder %s23, 1
      %p121 = por %p119, %p120
      %p123 = scmp.ne.s32.totalorder %s106, %s122
      %p124 = scmp.eq.s32.totalorder %s23, 0
      %p125 = por %p123, %p124
      %s126 = ssub.s32 %s25, %s39
      %p127 = scmp.eq.s32.totalorder %s126, 0
      %s129 = sadd.s32 %s128, 1
      %s130 = scalar_select %p127, %s128, %s129
      %p133 = pneg %p127
      %p134 = scmp.eq.s32.totalorder %s17, 1
      %p135 = por %p133, %p134
      %p136 = scmp.ne.s32.totalorder %s128, %s131
      %p137 = scmp.eq.s32.totalorder %s17, 0
      %p138 = por %p136, %p137
      %p139 = scmp.ne.s32.totalorder %s128, %s131
      %p140 = scmp.eq.s32.totalorder %s22, 1
      %p141 = por %p139, %p140
      %p142 = scmp.ne.s32.totalorder %s131, %s132
      %p143 = scmp.eq.s32.totalorder %s22, 0
      %p144 = por %p142, %p143
      %p145 = scmp.ne.s32.totalorder %s131, %s132
      %p146 = scmp.eq.s32.totalorder %s23, 1
      %p147 = por %p145, %p146
      %p149 = scmp.ne.s32.totalorder %s132, %s148
      %p150 = scmp.eq.s32.totalorder %s23, 0
      %p151 = por %p149, %p150
      %s152 = ssub.s32 %s24, %s43
      %s153 = ssub.s32 %s25, %s39
      %s154 = sor.u32 %s152, %s153
      %p155 = scmp.eq.s32.totalorder %s154, 0
      %s157 = sadd.s32 %s156, 1
      %s158 = scalar_select %p155, %s156, %s157
      %p161 = pneg %p155
      %p162 = scmp.eq.s32.totalorder %s17, 1
      %p163 = por %p161, %p162
      %p164 = scmp.ne.s32.totalorder %s156, %s159
      %p165 = scmp.eq.s32.totalorder %s17, 0
      %p166 = por %p164, %p165
      %p167 = scmp.ne.s32.totalorder %s156, %s159
      %p168 = scmp.eq.s32.totalorder %s22, 1
      %p169 = por %p167, %p168
      %p170 = scmp.ne.s32.totalorder %s159, %s160
      %p171 = scmp.eq.s32.totalorder %s22, 0
      %p172 = por %p170, %p171
      %p173 = scmp.ne.s32.totalorder %s159, %s160
      %p174 = scmp.eq.s32.totalorder %s23, 1
      %p175 = por %p173, %p174
      %p177 = scmp.ne.s32.totalorder %s160, %s176
      %p178 = scmp.eq.s32.totalorder %s23, 0
      %p179 = por %p177, %p178
      %p180 = scmp.le.s32.totalorder 1, %s17
      %p181 = scmp.lt.s32.totalorder %s17, 3
      %p182 = pnand %p180, %p181
      %p183 = pneg %p182
      // Predicated region
      $region9: #{tpu_custom_call.1} parent=5 // pred_check
        _
      $region10: #{tpu_custom_call.1} parent=5 // pred_check_branch
        %185 = sbr.rel (%p182) target = $region12
      $region11: #{tpu_custom_call.1} parent=5 // pred_region
        %s186 = ssub.s32 %s17, 1
        // Predicated region
        $region13: #{tpu_custom_call.1} parent=11 // pred_check
          %p187 = pneg %p92
        $region14: #{tpu_custom_call.1} parent=11 // pred_check_branch
          %189 = sbr.rel (%p187) target = $region16
        $region15: #{tpu_custom_call.1} parent=11 // pred_region
          %s190 = smul.u32 16, %s29
          %192 = vsyncadd [#allocation7], 0
          %s193 = sadd.s32 %s28, %s190
          %s194 = smul.addr %s193, 4
          %s195 = scalar_lea.hbm %s1, %s194
          %s196 = sshll.u32 %s195, 4
          %s197 = int_to_ptr.hbm [resolvable:$true] %s196
          %s198 = sshll.u32 [#allocation6], 4
          %s199 = int_to_ptr.vmem [resolvable:$true] %s198
          %204 = dma.hbm_to_vmem [thread:$0]  %s197, 1024, %s199, [#allocation7], 64, 64, 4
        $region16: #{tpu_custom_call.1} parent=11 // pred_fallthru
          _
        // Predicated region
        $region17: #{tpu_custom_call.1} parent=11 // pred_check
          %p205 = pneg %p118
        $region18: #{tpu_custom_call.1} parent=11 // pred_check_branch
          %207 = sbr.rel (%p205) target = $region20
        $region19: #{tpu_custom_call.1} parent=11 // pred_region
          %p208 = scmp.lt.s32.totalorder %s28, 0
          %s209 = scalar_select %p208, %s28, 0
          %s210 = scalar_lea.vmem %s2, %s209
        $region20: #{tpu_custom_call.1} parent=11 // pred_fallthru
          _
        // Predicated region
        $region21: #{tpu_custom_call.1} parent=11 // pred_check
          %p211 = pneg %p144
        $region22: #{tpu_custom_call.1} parent=11 // pred_check_branch
          %213 = sbr.rel (%p211) target = $region24
        $region23: #{tpu_custom_call.1} parent=11 // pred_region
          %p214 = scmp.lt.s32.totalorder %s28, 0
          %s215 = scalar_select %p214, %s28, 0
          %s216 = scalar_lea.vmem %s3, %s215
        $region24: #{tpu_custom_call.1} parent=11 // pred_fallthru
          _
      $region12: #{tpu_custom_call.1} parent=5 // pred_fallthru
        _
      %p217 = scmp.lt.s32.totalorder %s17, 2
      // Predicated region
      $region25: #{tpu_custom_call.1} parent=5 // pred_check
        %p218 = pneg %p217
      $region26: #{tpu_custom_call.1} parent=5 // pred_check_branch
        %220 = sbr.rel (%p218) target = $region28
      $region27: #{tpu_custom_call.1} parent=5 // pred_region
        // Predicated region
        $region29: #{tpu_custom_call.1} parent=27 // pred_check
          %p221 = pneg %p58
        $region30: #{tpu_custom_call.1} parent=27 // pred_check_branch
          %223 = sbr.rel (%p221) target = $region32
        $region31: #{tpu_custom_call.1} parent=27 // pred_region
          %s224 = sand.u32 %s48, 1
          %s225 = scalar_lea.sflag [#allocation4], %s224
          %s226 = sand.u32 %s48, 1
          %s227 = smul.addr %s226, 128
          %s228 = scalar_lea.vmem [#allocation3], %s227
          %s229 = smul.u32 32, %s24
          %231 = vsyncadd %s225, 0
          %s232 = sadd.s32 %s26, %s229
          %s233 = smul.addr %s232, 4
          %s234 = scalar_lea.hbm %s0, %s233
          %s235 = sshll.u32 %s234, 4
          %s236 = int_to_ptr.hbm [resolvable:$true] %s235
          %s237 = sshll.u32 %s228, 4
          %s238 = int_to_ptr.vmem [resolvable:$true] %s237
          %243 = dma.hbm_to_vmem [thread:$0]  %s236, 2048, %s238, %s225, 64, 64, 4
        $region32: #{tpu_custom_call.1} parent=27 // pred_fallthru
          _
      $region28: #{tpu_custom_call.1} parent=5 // pred_fallthru
        _
      %p244 = scmp.le.s32.totalorder 1, %s17
      %p245 = scmp.lt.s32.totalorder %s17, 3
      %p246 = pnand %p244, %p245
      %p247 = pneg %p246
      // Predicated region
      $region33: #{tpu_custom_call.1} parent=5 // pred_check
        _
      $region34: #{tpu_custom_call.1} parent=5 // pred_check_branch
        %249 = sbr.rel (%p246) target = $region36
      $region35: #{tpu_custom_call.1} parent=5 // pred_region
        %s250 = ssub.s32 %s17, 1
        %s251 = sand.u32 %s51, 1
        %s252 = scalar_lea.sflag [#allocation4], %s251
        %s253 = sand.u32 %s51, 1
        %s254 = smul.addr %s253, 128
        %s255 = scalar_lea.vmem [#allocation3], %s254
        // Predicated region
        $region37: #{tpu_custom_call.1} parent=35 // pred_check
          %p256 = pneg %p64
        $region38: #{tpu_custom_call.1} parent=35 // pred_check_branch
          %258 = sbr.rel (%p256) target = $region40
        $region39: #{tpu_custom_call.1} parent=35 // pred_region
          %260 = dma.done %s252, 2048
        $region40: #{tpu_custom_call.1} parent=35 // pred_fallthru
          _
        // Predicated region
        $region41: #{tpu_custom_call.1} parent=35 // pred_check
          %p261 = pneg %p92
        $region42: #{tpu_custom_call.1} parent=35 // pred_check_branch
          %263 = sbr.rel (%p261) target = $region44
        $region43: #{tpu_custom_call.1} parent=35 // pred_region
          %265 = dma.done [#allocation7], 1024
        $region44: #{tpu_custom_call.1} parent=35 // pred_fallthru
          _
        %s266 = sand.u32 %s51, 1
        %s267 = scalar_lea.sflag [#allocation4], %s266
        %s268 = sand.u32 %s51, 1
        %s269 = smul.addr %s268, 128
        %s270 = scalar_lea.vmem [#allocation3], %s269
        %p271 = pneg %p64
        %p272 = pneg %p61
        %p273 = pneg %p92
        %p274 = pneg %p89
        %p275 = scmp.lt.s32.totalorder %s28, 0
        %s276 = scalar_select %p275, %s28, 0
        %s277 = scalar_lea.vmem %s2, %s276
        %p278 = pneg %p118
        %p279 = pneg %p115
        %p280 = scmp.lt.s32.totalorder %s28, 0
        %s281 = scalar_select %p280, %s28, 0
        %s282 = scalar_lea.vmem %s3, %s281
        %p283 = pneg %p144
        %p284 = pneg %p141
        %p285 = pneg %p172
        %p286 = pneg %p169
        %s287 = sand.u32 %s159, 1
        %s288 = scalar_lea.sflag [#allocation5], %s287
        %s289 = sand.u32 %s159, 1
        %s290 = smul.addr %s289, 128
        %s291 = scalar_lea.vmem [#allocation8], %s290
        %s292 = smul.u32 32, %s27
        %s293 = smul.u32 16, %s29
        %p294 = scmp.lt.s32.totalorder %s28, 0
        %s295 = scalar_select %p294, %s28, 0
        %s296 = scalar_lea.vmem %s2, %s295
        %p297 = scmp.lt.s32.totalorder %s28, 0
        %s298 = scalar_select %p297, %s28, 0
        %s299 = scalar_lea.vmem %s3, %s298
        %s300 = smul.u32 32, %s27
        %p301 = scmp.eq.s32.totalorder %s29, 0
        // Predicated region
        $region45: #{tpu_custom_call.1} parent=35 // pred_check
          %p302 = pneg %p301
        $region46: #{tpu_custom_call.1} parent=35 // pred_check_branch
          %304 = sbr.rel (%p302) target = $region48
        $region47: #{tpu_custom_call.1} parent=35 // pred_region
          %305 = vst [vmem:[#allocation2] sm:$0xff] 0.0
          %306 = vst [vmem:[#allocation2 + $0x8] sm:$0xff] 0.0
          %307 = vst [vmem:[#allocation2 + $0x10] sm:$0xff] 0.0
          %308 = vst [vmem:[#allocation2 + $0x18] sm:$0xff] 0.0
          %309 = vst [vmem:[#allocation2 + $0x20] sm:$0xff] 0.0
          %310 = vst [vmem:[#allocation2 + $0x28] sm:$0xff] 0.0
          %311 = vst [vmem:[#allocation2 + $0x30] sm:$0xff] 0.0
          %312 = vst [vmem:[#allocation2 + $0x38] sm:$0xff] 0.0
          %313 = vst [vmem:[#allocation2 + $0x40] sm:$0xff] 0.0
          %314 = vst [vmem:[#allocation2 + $0x48] sm:$0xff] 0.0
          %315 = vst [vmem:[#allocation2 + $0x50] sm:$0xff] 0.0
          %316 = vst [vmem:[#allocation2 + $0x58] sm:$0xff] 0.0
          %317 = vst [vmem:[#allocation2 + $0x60] sm:$0xff] 0.0
          %318 = vst [vmem:[#allocation2 + $0x68] sm:$0xff] 0.0
          %319 = vst [vmem:[#allocation2 + $0x70] sm:$0xff] 0.0
          %320 = vst [vmem:[#allocation2 + $0x78] sm:$0xff] 0.0
          %321 = vst [vmem:[#allocation2 + $0x80] sm:$0xff] 0.0
          %322 = vst [vmem:[#allocation2 + $0x88] sm:$0xff] 0.0
          %323 = vst [vmem:[#allocation2 + $0x90] sm:$0xff] 0.0
          %324 = vst [vmem:[#allocation2 + $0x98] sm:$0xff] 0.0
          %325 = vst [vmem:[#allocation2 + $0xa0] sm:$0xff] 0.0
          %326 = vst [vmem:[#allocation2 + $0xa8] sm:$0xff] 0.0
          %327 = vst [vmem:[#allocation2 + $0xb0] sm:$0xff] 0.0
          %328 = vst [vmem:[#allocation2 + $0xb8] sm:$0xff] 0.0
          %329 = vst [vmem:[#allocation2 + $0xc0] sm:$0xff] 0.0
          %330 = vst [vmem:[#allocation2 + $0xc8] sm:$0xff] 0.0
          %331 = vst [vmem:[#allocation2 + $0xd0] sm:$0xff] 0.0
          %332 = vst [vmem:[#allocation2 + $0xd8] sm:$0xff] 0.0
          %333 = vst [vmem:[#allocation2 + $0xe0] sm:$0xff] 0.0
          %334 = vst [vmem:[#allocation2 + $0xe8] sm:$0xff] 0.0
          %335 = vst [vmem:[#allocation2 + $0xf0] sm:$0xff] 0.0
          %336 = vst [vmem:[#allocation2 + $0xf8] sm:$0xff] 0.0
        $region48: #{tpu_custom_call.1} parent=35 // pred_fallthru
          _
        %v337 = vld [vmem:[#allocation2] sm:$0xff]
        %v338 = vld [vmem:[#allocation2 + $0x8] sm:$0xff]
        %v339 = vld [vmem:[#allocation2 + $0x10] sm:$0xff]
        %v340 = vld [vmem:[#allocation2 + $0x18] sm:$0xff]
        %v341 = vld [vmem:[#allocation2 + $0x20] sm:$0xff]
        %v342 = vld [vmem:[#allocation2 + $0x28] sm:$0xff]
        %v343 = vld [vmem:[#allocation2 + $0x30] sm:$0xff]
        %v344 = vld [vmem:[#allocation2 + $0x38] sm:$0xff]
        %v345 = vld [vmem:[#allocation2 + $0x40] sm:$0xff]
        %v346 = vld [vmem:[#allocation2 + $0x48] sm:$0xff]
        %v347 = vld [vmem:[#allocation2 + $0x50] sm:$0xff]
        %v348 = vld [vmem:[#allocation2 + $0x58] sm:$0xff]
        %v349 = vld [vmem:[#allocation2 + $0x60] sm:$0xff]
        %v350 = vld [vmem:[#allocation2 + $0x68] sm:$0xff]
        %v351 = vld [vmem:[#allocation2 + $0x70] sm:$0xff]
        %v352 = vld [vmem:[#allocation2 + $0x78] sm:$0xff]
        %v353 = vld [vmem:[#allocation2 + $0x80] sm:$0xff]
        %v354 = vld [vmem:[#allocation2 + $0x88] sm:$0xff]
        %v355 = vld [vmem:[#allocation2 + $0x90] sm:$0xff]
        %v356 = vld [vmem:[#allocation2 + $0x98] sm:$0xff]
        %v357 = vld [vmem:[#allocation2 + $0xa0] sm:$0xff]
        %v358 = vld [vmem:[#allocation2 + $0xa8] sm:$0xff]
        %v359 = vld [vmem:[#allocation2 + $0xb0] sm:$0xff]
        %v360 = vld [vmem:[#allocation2 + $0xb8] sm:$0xff]
        %v361 = vld [vmem:[#allocation2 + $0xc0] sm:$0xff]
        %v362 = vld [vmem:[#allocation2 + $0xc8] sm:$0xff]
        %v363 = vld [vmem:[#allocation2 + $0xd0] sm:$0xff]
        %v364 = vld [vmem:[#allocation2 + $0xd8] sm:$0xff]
        %v365 = vld [vmem:[#allocation2 + $0xe0] sm:$0xff]
        %v366 = vld [vmem:[#allocation2 + $0xe8] sm:$0xff]
        %v367 = vld [vmem:[#allocation2 + $0xf0] sm:$0xff]
        %v368 = vld [vmem:[#allocation2 + $0xf8] sm:$0xff]
        %v369 = vld [vmem:[%s255] sm:$0xf]
        %v370 = vld [vmem:[%s255 + $0x4] sm:$0xf]
        %v371 = vld [vmem:[%s255 + $0x8] sm:$0xf]
        %v372 = vld [vmem:[%s255 + $0xc] sm:$0xf]
        %v373 = vld [vmem:[%s255 + $0x10] sm:$0xf]
        %v374 = vld [vmem:[%s255 + $0x14] sm:$0xf]
        %v375 = vld [vmem:[%s255 + $0x18] sm:$0xf]
        %v376 = vld [vmem:[%s255 + $0x1c] sm:$0xf]
        %v377 = vld [vmem:[%s255 + $0x20] sm:$0xf]
        %v378 = vld [vmem:[%s255 + $0x24] sm:$0xf]
        %v379 = vld [vmem:[%s255 + $0x28] sm:$0xf]
        %v380 = vld [vmem:[%s255 + $0x2c] sm:$0xf]
        %v381 = vld [vmem:[%s255 + $0x30] sm:$0xf]
        %v382 = vld [vmem:[%s255 + $0x34] sm:$0xf]
        %v383 = vld [vmem:[%s255 + $0x38] sm:$0xf]
        %v384 = vld [vmem:[%s255 + $0x3c] sm:$0xf]
        %v385 = vld [vmem:[%s255 + $0x40] sm:$0xf]
        %v386 = vld [vmem:[%s255 + $0x44] sm:$0xf]
        %v387 = vld [vmem:[%s255 + $0x48] sm:$0xf]
        %v388 = vld [vmem:[%s255 + $0x4c] sm:$0xf]
        %v389 = vld [vmem:[%s255 + $0x50] sm:$0xf]
        %v390 = vld [vmem:[%s255 + $0x54] sm:$0xf]
        %v391 = vld [vmem:[%s255 + $0x58] sm:$0xf]
        %v392 = vld [vmem:[%s255 + $0x5c] sm:$0xf]
        %v393 = vld [vmem:[%s255 + $0x60] sm:$0xf]
        %v394 = vld [vmem:[%s255 + $0x64] sm:$0xf]
        %v395 = vld [vmem:[%s255 + $0x68] sm:$0xf]
        %v396 = vld [vmem:[%s255 + $0x6c] sm:$0xf]
        %v397 = vld [vmem:[%s255 + $0x70] sm:$0xf]
        %v398 = vld [vmem:[%s255 + $0x74] sm:$0xf]
        %v399 = vld [vmem:[%s255 + $0x78] sm:$0xf]
        %v400 = vld [vmem:[%s255 + $0x7c] sm:$0xf]
        %v401 = vld [vmem:[#allocation6] sm:$0xf]
        %v402 = vld [vmem:[#allocation6 + $0x4] sm:$0xf]
        %v403 = vld [vmem:[#allocation6 + $0x8] sm:$0xf]
        %v404 = vld [vmem:[#allocation6 + $0xc] sm:$0xf]
        %v405 = vld [vmem:[#allocation6 + $0x10] sm:$0xf]
        %v406 = vld [vmem:[#allocation6 + $0x14] sm:$0xf]
        %v407 = vld [vmem:[#allocation6 + $0x18] sm:$0xf]
        %v408 = vld [vmem:[#allocation6 + $0x1c] sm:$0xf]
        %v409 = vld [vmem:[#allocation6 + $0x20] sm:$0xf]
        %v410 = vld [vmem:[#allocation6 + $0x24] sm:$0xf]
        %v411 = vld [vmem:[#allocation6 + $0x28] sm:$0xf]
        %v412 = vld [vmem:[#allocation6 + $0x2c] sm:$0xf]
        %v413 = vld [vmem:[#allocation6 + $0x30] sm:$0xf]
        %v414 = vld [vmem:[#allocation6 + $0x34] sm:$0xf]
        %v415 = vld [vmem:[#allocation6 + $0x38] sm:$0xf]
        %v416 = vld [vmem:[#allocation6 + $0x3c] sm:$0xf]
        %v449 = vunpack.c.l.b16 %v369
        %v450 = vunpack.c.l.b16 %v370
        %v451 = vunpack.c.l.b16 %v371
        %v452 = vunpack.c.l.b16 %v372
        %v453 = vunpack.c.l.b16 %v373
        %v454 = vunpack.c.l.b16 %v374
        %v455 = vunpack.c.l.b16 %v375
        %v456 = vunpack.c.l.b16 %v376
        %v457 = vunpack.c.l.b16 %v377
        %v458 = vunpack.c.l.b16 %v378
        %v459 = vunpack.c.l.b16 %v379
        %v460 = vunpack.c.l.b16 %v380
        %v461 = vunpack.c.l.b16 %v381
        %v462 = vunpack.c.l.b16 %v382
        %v463 = vunpack.c.l.b16 %v383
        %v464 = vunpack.c.l.b16 %v384
        %v465 = vunpack.c.l.b16 %v385
        %v466 = vunpack.c.l.b16 %v386
        %v467 = vunpack.c.l.b16 %v387
        %v468 = vunpack.c.l.b16 %v388
        %v469 = vunpack.c.l.b16 %v389
        %v470 = vunpack.c.l.b16 %v390
        %v471 = vunpack.c.l.b16 %v391
        %v472 = vunpack.c.l.b16 %v392
        %v473 = vunpack.c.l.b16 %v393
        %v474 = vunpack.c.l.b16 %v394
        %v475 = vunpack.c.l.b16 %v395
        %v476 = vunpack.c.l.b16 %v396
        %v477 = vunpack.c.l.b16 %v397
        %v478 = vunpack.c.l.b16 %v398
        %v479 = vunpack.c.l.b16 %v399
        %v480 = vunpack.c.l.b16 %v400
        %v481 = vpack.c.b16 %v450, %v449
        %v482 = vpack.c.b16 %v452, %v451
        %v483 = vpack.c.b16 %v454, %v453
        %v484 = vpack.c.b16 %v456, %v455
        %v485 = vpack.c.b16 %v458, %v457
        %v486 = vpack.c.b16 %v460, %v459
        %v487 = vpack.c.b16 %v462, %v461
        %v488 = vpack.c.b16 %v464, %v463
        %v489 = vpack.c.b16 %v466, %v465
        %v490 = vpack.c.b16 %v468, %v467
        %v491 = vpack.c.b16 %v470, %v469
        %v492 = vpack.c.b16 %v472, %v471
        %v493 = vpack.c.b16 %v474, %v473
        %v494 = vpack.c.b16 %v476, %v475
        %v495 = vpack.c.b16 %v478, %v477
        %v496 = vpack.c.b16 %v480, %v479
        %v529 = vunpack.c.l.b16 %v401
        %v530 = vunpack.c.l.b16 %v402
        %v531 = vunpack.c.l.b16 %v403
        %v532 = vunpack.c.l.b16 %v404
        %v533 = vunpack.c.l.b16 %v405
        %v534 = vunpack.c.l.b16 %v406
        %v535 = vunpack.c.l.b16 %v407
        %v536 = vunpack.c.l.b16 %v408
        %v537 = vunpack.c.l.b16 %v409
        %v538 = vunpack.c.l.b16 %v410
        %v539 = vunpack.c.l.b16 %v411
        %v540 = vunpack.c.l.b16 %v412
        %v541 = vunpack.c.l.b16 %v413
        %v542 = vunpack.c.l.b16 %v414
        %v543 = vunpack.c.l.b16 %v415
        %v544 = vunpack.c.l.b16 %v416
        %v545 = vpack.c.b16 %v530, %v529
        %v546 = vpack.c.b16 %v532, %v531
        %v547 = vpack.c.b16 %v534, %v533
        %v548 = vpack.c.b16 %v536, %v535
        %v549 = vpack.c.b16 %v538, %v537
        %v550 = vpack.c.b16 %v540, %v539
        %v551 = vpack.c.b16 %v542, %v541
        %v552 = vpack.c.b16 %v544, %v543
        %561 = vmatpush.bf16.msra.mxu0 %v552
        %562 = vmatpush.bf16.msra.mxu0 %v551
        %563 = vmatpush.bf16.msra.mxu0 %v550
        %564 = vmatpush.bf16.msra.mxu0 %v549
        %565 = vmatpush.bf16.msra.mxu0 %v548
        %566 = vmatpush.bf16.msra.mxu0 %v547
        %567 = vmatpush.bf16.msra.mxu0 %v546
        %568 = vmatpush.bf16.msra.mxu0 %v545
        %569 = vmatmul.bf16.gmra.mxu0 %v481
        %v570 = vpop.f32.mrf.mxu0
        %v571 = vadd.f32 0.0, %v570
        %v572 = vpop.f32.mrf.mxu0
        %v573 = vadd.f32 0.0, %v572
        %574 = vmatmul.bf16.gmra.mxu0 %v482
        %v575 = vpop.f32.mrf.mxu0
        %v576 = vadd.f32 0.0, %v575
        %v577 = vpop.f32.mrf.mxu0
        %v578 = vadd.f32 0.0, %v577
        %579 = vmatmul.bf16.gmra.mxu0 %v483
        %v580 = vpop.f32.mrf.mxu0
        %v581 = vadd.f32 0.0, %v580
        %v582 = vpop.f32.mrf.mxu0
        %v583 = vadd.f32 0.0, %v582
        %584 = vmatmul.bf16.gmra.mxu0 %v484
        %v585 = vpop.f32.mrf.mxu0
        %v586 = vadd.f32 0.0, %v585
        %v587 = vpop.f32.mrf.mxu0
        %v588 = vadd.f32 0.0, %v587
        %589 = vmatmul.bf16.gmra.mxu0 %v485
        %v590 = vpop.f32.mrf.mxu0
        %v591 = vadd.f32 0.0, %v590
        %v592 = vpop.f32.mrf.mxu0
        %v593 = vadd.f32 0.0, %v592
        %594 = vmatmul.bf16.gmra.mxu0 %v486
        %v595 = vpop.f32.mrf.mxu0
        %v596 = vadd.f32 0.0, %v595
        %v597 = vpop.f32.mrf.mxu0
        %v598 = vadd.f32 0.0, %v597
        %599 = vmatmul.bf16.gmra.mxu0 %v487
        %v600 = vpop.f32.mrf.mxu0
        %v601 = vadd.f32 0.0, %v600
        %v602 = vpop.f32.mrf.mxu0
        %v603 = vadd.f32 0.0, %v602
        %604 = vmatmul.bf16.gmra.mxu0 %v488
        %v605 = vpop.f32.mrf.mxu0
        %v606 = vadd.f32 0.0, %v605
        %v607 = vpop.f32.mrf.mxu0
        %v608 = vadd.f32 0.0, %v607
        %609 = vmatmul.bf16.gmra.mxu0 %v489
        %v610 = vpop.f32.mrf.mxu0
        %v611 = vadd.f32 0.0, %v610
        %v612 = vpop.f32.mrf.mxu0
        %v613 = vadd.f32 0.0, %v612
        %614 = vmatmul.bf16.gmra.mxu0 %v490
        %v615 = vpop.f32.mrf.mxu0
        %v616 = vadd.f32 0.0, %v615
        %v617 = vpop.f32.mrf.mxu0
        %v618 = vadd.f32 0.0, %v617
        %619 = vmatmul.bf16.gmra.mxu0 %v491
        %v620 = vpop.f32.mrf.mxu0
        %v621 = vadd.f32 0.0, %v620
        %v622 = vpop.f32.mrf.mxu0
        %v623 = vadd.f32 0.0, %v622
        %624 = vmatmul.bf16.gmra.mxu0 %v492
        %v625 = vpop.f32.mrf.mxu0
        %v626 = vadd.f32 0.0, %v625
        %v627 = vpop.f32.mrf.mxu0
        %v628 = vadd.f32 0.0, %v627
        %629 = vmatmul.bf16.gmra.mxu0 %v493
        %v630 = vpop.f32.mrf.mxu0
        %v631 = vadd.f32 0.0, %v630
        %v632 = vpop.f32.mrf.mxu0
        %v633 = vadd.f32 0.0, %v632
        %634 = vmatmul.bf16.gmra.mxu0 %v494
        %v635 = vpop.f32.mrf.mxu0
        %v636 = vadd.f32 0.0, %v635
        %v637 = vpop.f32.mrf.mxu0
        %v638 = vadd.f32 0.0, %v637
        %639 = vmatmul.bf16.gmra.mxu0 %v495
        %v640 = vpop.f32.mrf.mxu0
        %v641 = vadd.f32 0.0, %v640
        %v642 = vpop.f32.mrf.mxu0
        %v643 = vadd.f32 0.0, %v642
        %644 = vmatmul.bf16.gmra.mxu0 %v496
        %v645 = vpop.f32.mrf.mxu0
        %v646 = vadd.f32 0.0, %v645
        %v647 = vpop.f32.mrf.mxu0
        %v648 = vadd.f32 0.0, %v647
        %649 = vdwg.mxu0
        %v650 = vadd.f32 %v337, %v571
        %v651 = vadd.f32 %v338, %v573
        %v652 = vadd.f32 %v339, %v576
        %v653 = vadd.f32 %v340, %v578
        %v654 = vadd.f32 %v341, %v581
        %v655 = vadd.f32 %v342, %v583
        %v656 = vadd.f32 %v343, %v586
        %v657 = vadd.f32 %v344, %v588
        %v658 = vadd.f32 %v345, %v591
        %v659 = vadd.f32 %v346, %v593
        %v660 = vadd.f32 %v347, %v596
        %v661 = vadd.f32 %v348, %v598
        %v662 = vadd.f32 %v349, %v601
        %v663 = vadd.f32 %v350, %v603
        %v664 = vadd.f32 %v351, %v606
        %v665 = vadd.f32 %v352, %v608
        %v666 = vadd.f32 %v353, %v611
        %v667 = vadd.f32 %v354, %v613
        %v668 = vadd.f32 %v355, %v616
        %v669 = vadd.f32 %v356, %v618
        %v670 = vadd.f32 %v357, %v621
        %v671 = vadd.f32 %v358, %v623
        %v672 = vadd.f32 %v359, %v626
        %v673 = vadd.f32 %v360, %v628
        %v674 = vadd.f32 %v361, %v631
        %v675 = vadd.f32 %v362, %v633
        %v676 = vadd.f32 %v363, %v636
        %v677 = vadd.f32 %v364, %v638
        %v678 = vadd.f32 %v365, %v641
        %v679 = vadd.f32 %v366, %v643
        %v680 = vadd.f32 %v367, %v646
        %v681 = vadd.f32 %v368, %v648
        %682 = vst [vmem:[#allocation2] sm:$0xff] %v650
        %683 = vst [vmem:[#allocation2 + $0x8] sm:$0xff] %v651
        %684 = vst [vmem:[#allocation2 + $0x10] sm:$0xff] %v652
        %685 = vst [vmem:[#allocation2 + $0x18] sm:$0xff] %v653
        %686 = vst [vmem:[#allocation2 + $0x20] sm:$0xff] %v654
        %687 = vst [vmem:[#allocation2 + $0x28] sm:$0xff] %v655
        %688 = vst [vmem:[#allocation2 + $0x30] sm:$0xff] %v656
        %689 = vst [vmem:[#allocation2 + $0x38] sm:$0xff] %v657
        %690 = vst [vmem:[#allocation2 + $0x40] sm:$0xff] %v658
        %691 = vst [vmem:[#allocation2 + $0x48] sm:$0xff] %v659
        %692 = vst [vmem:[#allocation2 + $0x50] sm:$0xff] %v660
        %693 = vst [vmem:[#allocation2 + $0x58] sm:$0xff] %v661
        %694 = vst [vmem:[#allocation2 + $0x60] sm:$0xff] %v662
        %695 = vst [vmem:[#allocation2 + $0x68] sm:$0xff] %v663
        %696 = vst [vmem:[#allocation2 + $0x70] sm:$0xff] %v664
        %697 = vst [vmem:[#allocation2 + $0x78] sm:$0xff] %v665
        %698 = vst [vmem:[#allocation2 + $0x80] sm:$0xff] %v666
        %699 = vst [vmem:[#allocation2 + $0x88] sm:$0xff] %v667
        %700 = vst [vmem:[#allocation2 + $0x90] sm:$0xff] %v668
        %701 = vst [vmem:[#allocation2 + $0x98] sm:$0xff] %v669
        %702 = vst [vmem:[#allocation2 + $0xa0] sm:$0xff] %v670
        %703 = vst [vmem:[#allocation2 + $0xa8] sm:$0xff] %v671
        %704 = vst [vmem:[#allocation2 + $0xb0] sm:$0xff] %v672
        %705 = vst [vmem:[#allocation2 + $0xb8] sm:$0xff] %v673
        %706 = vst [vmem:[#allocation2 + $0xc0] sm:$0xff] %v674
        %707 = vst [vmem:[#allocation2 + $0xc8] sm:$0xff] %v675
        %708 = vst [vmem:[#allocation2 + $0xd0] sm:$0xff] %v676
        %709 = vst [vmem:[#allocation2 + $0xd8] sm:$0xff] %v677
        %710 = vst [vmem:[#allocation2 + $0xe0] sm:$0xff] %v678
        %711 = vst [vmem:[#allocation2 + $0xe8] sm:$0xff] %v679
        %712 = vst [vmem:[#allocation2 + $0xf0] sm:$0xff] %v680
        %713 = vst [vmem:[#allocation2 + $0xf8] sm:$0xff] %v681
        // Predicated region
        $region49: #{tpu_custom_call.1} parent=35 // pred_check
          %p714 = pneg %p301
        $region50: #{tpu_custom_call.1} parent=35 // pred_check_branch
          %716 = sbr.rel (%p714) target = $region52
        $region51: #{tpu_custom_call.1} parent=35 // pred_region
          %v717 = vld [vmem:[#allocation2] sm:$0xff]
          %v718 = vld [vmem:[#allocation2 + $0x8] sm:$0xff]
          %v719 = vld [vmem:[#allocation2 + $0x10] sm:$0xff]
          %v720 = vld [vmem:[#allocation2 + $0x18] sm:$0xff]
          %v721 = vld [vmem:[#allocation2 + $0x20] sm:$0xff]
          %v722 = vld [vmem:[#allocation2 + $0x28] sm:$0xff]
          %v723 = vld [vmem:[#allocation2 + $0x30] sm:$0xff]
          %v724 = vld [vmem:[#allocation2 + $0x38] sm:$0xff]
          %v725 = vld [vmem:[#allocation2 + $0x40] sm:$0xff]
          %v726 = vld [vmem:[#allocation2 + $0x48] sm:$0xff]
          %v727 = vld [vmem:[#allocation2 + $0x50] sm:$0xff]
          %v728 = vld [vmem:[#allocation2 + $0x58] sm:$0xff]
          %v729 = vld [vmem:[#allocation2 + $0x60] sm:$0xff]
          %v730 = vld [vmem:[#allocation2 + $0x68] sm:$0xff]
          %v731 = vld [vmem:[#allocation2 + $0x70] sm:$0xff]
          %v732 = vld [vmem:[#allocation2 + $0x78] sm:$0xff]
          %v733 = vld [vmem:[#allocation2 + $0x80] sm:$0xff]
          %v734 = vld [vmem:[#allocation2 + $0x88] sm:$0xff]
          %v735 = vld [vmem:[#allocation2 + $0x90] sm:$0xff]
          %v736 = vld [vmem:[#allocation2 + $0x98] sm:$0xff]
          %v737 = vld [vmem:[#allocation2 + $0xa0] sm:$0xff]
          %v738 = vld [vmem:[#allocation2 + $0xa8] sm:$0xff]
          %v739 = vld [vmem:[#allocation2 + $0xb0] sm:$0xff]
          %v740 = vld [vmem:[#allocation2 + $0xb8] sm:$0xff]
          %v741 = vld [vmem:[#allocation2 + $0xc0] sm:$0xff]
          %v742 = vld [vmem:[#allocation2 + $0xc8] sm:$0xff]
          %v743 = vld [vmem:[#allocation2 + $0xd0] sm:$0xff]
          %v744 = vld [vmem:[#allocation2 + $0xd8] sm:$0xff]
          %v745 = vld [vmem:[#allocation2 + $0xe0] sm:$0xff]
          %v746 = vld [vmem:[#allocation2 + $0xe8] sm:$0xff]
          %v747 = vld [vmem:[#allocation2 + $0xf0] sm:$0xff]
          %v748 = vld [vmem:[#allocation2 + $0xf8] sm:$0xff]
          %v749 = vld [vmem:[%s296] sm:$0x1]
          %v751 = vperm.slane %v749, 0
          %v753 = vmul.f32 %v717, %v751
          %v754 = vmul.f32 %v718, %v751
          %v755 = vmul.f32 %v719, %v751
          %v756 = vmul.f32 %v720, %v751
          %v757 = vmul.f32 %v721, %v751
          %v758 = vmul.f32 %v722, %v751
          %v759 = vmul.f32 %v723, %v751
          %v760 = vmul.f32 %v724, %v751
          %v761 = vmul.f32 %v725, %v751
          %v762 = vmul.f32 %v726, %v751
          %v763 = vmul.f32 %v727, %v751
          %v764 = vmul.f32 %v728, %v751
          %v765 = vmul.f32 %v729, %v751
          %v766 = vmul.f32 %v730, %v751
          %v767 = vmul.f32 %v731, %v751
          %v768 = vmul.f32 %v732, %v751
          %v769 = vmul.f32 %v733, %v751
          %v770 = vmul.f32 %v734, %v751
          %v771 = vmul.f32 %v735, %v751
          %v772 = vmul.f32 %v736, %v751
          %v773 = vmul.f32 %v737, %v751
          %v774 = vmul.f32 %v738, %v751
          %v775 = vmul.f32 %v739, %v751
          %v776 = vmul.f32 %v740, %v751
          %v777 = vmul.f32 %v741, %v751
          %v778 = vmul.f32 %v742, %v751
          %v779 = vmul.f32 %v743, %v751
          %v780 = vmul.f32 %v744, %v751
          %v781 = vmul.f32 %v745, %v751
          %v782 = vmul.f32 %v746, %v751
          %v783 = vmul.f32 %v747, %v751
          %v784 = vmul.f32 %v748, %v751
          %v785 = vld [vmem:[%s299] sm:$0x1]
          %v787 = vperm.slane %v785, 0
          %v789 = vadd.f32 %v753, %v787
          %v790 = vadd.f32 %v754, %v787
          %v791 = vadd.f32 %v755, %v787
          %v792 = vadd.f32 %v756, %v787
          %v793 = vadd.f32 %v757, %v787
          %v794 = vadd.f32 %v758, %v787
          %v795 = vadd.f32 %v759, %v787
          %v796 = vadd.f32 %v760, %v787
          %v797 = vadd.f32 %v761, %v787
          %v798 = vadd.f32 %v762, %v787
          %v799 = vadd.f32 %v763, %v787
          %v800 = vadd.f32 %v764, %v787
          %v801 = vadd.f32 %v765, %v787
          %v802 = vadd.f32 %v766, %v787
          %v803 = vadd.f32 %v767, %v787
          %v804 = vadd.f32 %v768, %v787
          %v805 = vadd.f32 %v769, %v787
          %v806 = vadd.f32 %v770, %v787
          %v807 = vadd.f32 %v771, %v787
          %v808 = vadd.f32 %v772, %v787
          %v809 = vadd.f32 %v773, %v787
          %v810 = vadd.f32 %v774, %v787
          %v811 = vadd.f32 %v775, %v787
          %v812 = vadd.f32 %v776, %v787
          %v813 = vadd.f32 %v777, %v787
          %v814 = vadd.f32 %v778, %v787
          %v815 = vadd.f32 %v779, %v787
          %v816 = vadd.f32 %v780, %v787
          %v817 = vadd.f32 %v781, %v787
          %v818 = vadd.f32 %v782, %v787
          %v819 = vadd.f32 %v783, %v787
          %v820 = vadd.f32 %v784, %v787
          %v821 = vmax.f32 %v789, 0.0
          %v822 = vmax.f32 %v790, 0.0
          %v823 = vmax.f32 %v791, 0.0
          %v824 = vmax.f32 %v792, 0.0
          %v825 = vmax.f32 %v793, 0.0
          %v826 = vmax.f32 %v794, 0.0
          %v827 = vmax.f32 %v795, 0.0
          %v828 = vmax.f32 %v796, 0.0
          %v829 = vmax.f32 %v797, 0.0
          %v830 = vmax.f32 %v798, 0.0
          %v831 = vmax.f32 %v799, 0.0
          %v832 = vmax.f32 %v800, 0.0
          %v833 = vmax.f32 %v801, 0.0
          %v834 = vmax.f32 %v802, 0.0
          %v835 = vmax.f32 %v803, 0.0
          %v836 = vmax.f32 %v804, 0.0
          %v837 = vmax.f32 %v805, 0.0
          %v838 = vmax.f32 %v806, 0.0
          %v839 = vmax.f32 %v807, 0.0
          %v840 = vmax.f32 %v808, 0.0
          %v841 = vmax.f32 %v809, 0.0
          %v842 = vmax.f32 %v810, 0.0
          %v843 = vmax.f32 %v811, 0.0
          %v844 = vmax.f32 %v812, 0.0
          %v845 = vmax.f32 %v813, 0.0
          %v846 = vmax.f32 %v814, 0.0
          %v847 = vmax.f32 %v815, 0.0
          %v848 = vmax.f32 %v816, 0.0
          %v849 = vmax.f32 %v817, 0.0
          %v850 = vmax.f32 %v818, 0.0
          %v851 = vmax.f32 %v819, 0.0
          %v852 = vmax.f32 %v820, 0.0
          %v853 = vpack.c.bf16 %v821, %v821
          %v854 = vpack.c.bf16 %v822, %v822
          %v855 = vpack.c.bf16 %v823, %v823
          %v856 = vpack.c.bf16 %v824, %v824
          %v857 = vpack.c.bf16 %v825, %v825
          %v858 = vpack.c.bf16 %v826, %v826
          %v859 = vpack.c.bf16 %v827, %v827
          %v860 = vpack.c.bf16 %v828, %v828
          %v861 = vpack.c.bf16 %v829, %v829
          %v862 = vpack.c.bf16 %v830, %v830
          %v863 = vpack.c.bf16 %v831, %v831
          %v864 = vpack.c.bf16 %v832, %v832
          %v865 = vpack.c.bf16 %v833, %v833
          %v866 = vpack.c.bf16 %v834, %v834
          %v867 = vpack.c.bf16 %v835, %v835
          %v868 = vpack.c.bf16 %v836, %v836
          %v869 = vpack.c.bf16 %v837, %v837
          %v870 = vpack.c.bf16 %v838, %v838
          %v871 = vpack.c.bf16 %v839, %v839
          %v872 = vpack.c.bf16 %v840, %v840
          %v873 = vpack.c.bf16 %v841, %v841
          %v874 = vpack.c.bf16 %v842, %v842
          %v875 = vpack.c.bf16 %v843, %v843
          %v876 = vpack.c.bf16 %v844, %v844
          %v877 = vpack.c.bf16 %v845, %v845
          %v878 = vpack.c.bf16 %v846, %v846
          %v879 = vpack.c.bf16 %v847, %v847
          %v880 = vpack.c.bf16 %v848, %v848
          %v881 = vpack.c.bf16 %v849, %v849
          %v882 = vpack.c.bf16 %v850, %v850
          %v883 = vpack.c.bf16 %v851, %v851
          %v884 = vpack.c.bf16 %v852, %v852
          %885 = vst [vmem:[%s291] sm:$0xf] %v853
          %886 = vst [vmem:[%s291 + $0x4] sm:$0xf] %v854
          %887 = vst [vmem:[%s291 + $0x8] sm:$0xf] %v855
          %888 = vst [vmem:[%s291 + $0xc] sm:$0xf] %v856
          %889 = vst [vmem:[%s291 + $0x10] sm:$0xf] %v857
          %890 = vst [vmem:[%s291 + $0x14] sm:$0xf] %v858
          %891 = vst [vmem:[%s291 + $0x18] sm:$0xf] %v859
          %892 = vst [vmem:[%s291 + $0x1c] sm:$0xf] %v860
          %893 = vst [vmem:[%s291 + $0x20] sm:$0xf] %v861
          %894 = vst [vmem:[%s291 + $0x24] sm:$0xf] %v862
          %895 = vst [vmem:[%s291 + $0x28] sm:$0xf] %v863
          %896 = vst [vmem:[%s291 + $0x2c] sm:$0xf] %v864
          %897 = vst [vmem:[%s291 + $0x30] sm:$0xf] %v865
          %898 = vst [vmem:[%s291 + $0x34] sm:$0xf] %v866
          %899 = vst [vmem:[%s291 + $0x38] sm:$0xf] %v867
          %900 = vst [vmem:[%s291 + $0x3c] sm:$0xf] %v868
          %901 = vst [vmem:[%s291 + $0x40] sm:$0xf] %v869
          %902 = vst [vmem:[%s291 + $0x44] sm:$0xf] %v870
          %903 = vst [vmem:[%s291 + $0x48] sm:$0xf] %v871
          %904 = vst [vmem:[%s291 + $0x4c] sm:$0xf] %v872
          %905 = vst [vmem:[%s291 + $0x50] sm:$0xf] %v873
          %906 = vst [vmem:[%s291 + $0x54] sm:$0xf] %v874
          %907 = vst [vmem:[%s291 + $0x58] sm:$0xf] %v875
          %908 = vst [vmem:[%s291 + $0x5c] sm:$0xf] %v876
          %909 = vst [vmem:[%s291 + $0x60] sm:$0xf] %v877
          %910 = vst [vmem:[%s291 + $0x64] sm:$0xf] %v878
          %911 = vst [vmem:[%s291 + $0x68] sm:$0xf] %v879
          %912 = vst [vmem:[%s291 + $0x6c] sm:$0xf] %v880
          %913 = vst [vmem:[%s291 + $0x70] sm:$0xf] %v881
          %914 = vst [vmem:[%s291 + $0x74] sm:$0xf] %v882
          %915 = vst [vmem:[%s291 + $0x78] sm:$0xf] %v883
          %916 = vst [vmem:[%s291 + $0x7c] sm:$0xf] %v884
        $region52: #{tpu_custom_call.1} parent=35 // pred_fallthru
          _
        %s917 = sand.u32 %s159, 1
        %s918 = scalar_lea.sflag [#allocation5], %s917
        %s919 = sand.u32 %s159, 1
        %s920 = smul.addr %s919, 128
        %s921 = scalar_lea.vmem [#allocation8], %s920
        // Predicated region
        $region53: #{tpu_custom_call.1} parent=35 // pred_check
          %p922 = pneg %p169
        $region54: #{tpu_custom_call.1} parent=35 // pred_check_branch
          %924 = sbr.rel (%p922) target = $region56
        $region55: #{tpu_custom_call.1} parent=35 // pred_region
          %s925 = smul.u32 32, %s27
          %927 = vsyncadd %s918, 0
          %s928 = sadd.s32 %s28, %s925
          %s929 = smul.addr %s928, 4
          %s930 = scalar_lea.hbm %s4, %s929
          %s931 = sshll.u32 %s921, 4
          %s932 = int_to_ptr.vmem [resolvable:$true] %s931
          %s933 = sshll.u32 %s930, 4
          %s934 = int_to_ptr.hbm [resolvable:$true] %s933
          %939 = dma.vmem_to_hbm [thread:$0]  %s932, 2048, %s934, %s918, 64, 64, 4
        $region56: #{tpu_custom_call.1} parent=35 // pred_fallthru
          _
      $region36: #{tpu_custom_call.1} parent=5 // pred_fallthru
        _
      %p940 = scmp.le.s32.totalorder 2, %s17
      // Predicated region
      $region57: #{tpu_custom_call.1} parent=5 // pred_check
        %p941 = pneg %p940
      $region58: #{tpu_custom_call.1} parent=5 // pred_check_branch
        %943 = sbr.rel (%p941) target = $region60
      $region59: #{tpu_custom_call.1} parent=5 // pred_region
        %s944 = ssub.s32 %s17, 2
        // Predicated region
        $region61: #{tpu_custom_call.1} parent=59 // pred_check
          %p945 = pneg %p175
        $region62: #{tpu_custom_call.1} parent=59 // pred_check_branch
          %947 = sbr.rel (%p945) target = $region64
        $region63: #{tpu_custom_call.1} parent=59 // pred_region
          %s948 = sand.u32 %s160, 1
          %s949 = scalar_lea.sflag [#allocation5], %s948
          %s950 = sand.u32 %s160, 1
          %s951 = smul.addr %s950, 128
          %s952 = scalar_lea.vmem [#allocation8], %s951
          %954 = dma.done %s949, 2048
        $region64: #{tpu_custom_call.1} parent=59 // pred_fallthru
          _
      $region60: #{tpu_custom_call.1} parent=5 // pred_fallthru
        _
    $region6: #{tpu_custom_call.1} parent=1 // loop_footer
      %s21 = sadd.s32 1, %s17
    $region7: #{tpu_custom_call.1} parent=1 // loop_footer_branch
      %16 = sbr.rel target = $region3
    $region8: #{tpu_custom_call.1} parent=1 // loop_exit
      _
    %955 = vsyncpa [#allocation4], 1
    %s956 = scalar_lea.sflag [#allocation4], 1
    %957 = vsyncpa %s956, 1
    %958 = vsyncpa [#allocation7], 1
    %959 = vsyncpa [#allocation5], 1
    %s960 = scalar_lea.sflag [#allocation5], 1
    %961 = vsyncpa %s960, 1

</llo_original>
